<compile_context>
chip_gen: v6e
topology: v6e:2x2x1
jax: 0.10.0
libtpu: 0.0.40
codegen_flags: <defaults>
</compile_context>

<pallas_src>
import jax
import jax.numpy as jnp
from jax.experimental import pallas as pl
from jax.experimental.pallas import tpu as pltpu

LANE = 128
EPS = 1e-5
NEG_SLOPE = 0.01


def _round_up(d, m):
    return ((d + m - 1) // m) * m


def fused_mlp_kernel(x_ref, *refs):
    """All MLP layers fused: y = BN(LeakyReLU(x @ W_t)), repeated per layer.

    No grid: the whole batch and all (padded) weights live in VMEM, so the
    batch-axis reduction that BatchNorm1d needs is done over the *full* batch
    in-kernel (BN would be silently wrong if N were ever tiled — keep the
    batch in a single block).
    """
    *w_refs, o_ref = refs
    y = x_ref[...].astype(jnp.float32)
    for w_ref in w_refs:  # static Python loop over layers -> fully unrolled
        # Linear (bias=False): single MXU pass per layer, f32 accumulate.
        y = jnp.dot(y, w_ref[...], preferred_element_type=jnp.float32)
        # LeakyReLU, negative_slope = 0.01
        y = jnp.where(y >= 0.0, y, NEG_SLOPE * y)
        # BatchNorm1d (training mode): per-feature batch mean, biased variance,
        # gamma=1 / beta=0 at init, eps=1e-5. Two-pass variance kept for
        # numerical robustness; the axis-0 reduction runs on the XLU slot.
        mean = jnp.mean(y, axis=0, keepdims=True)
        var = jnp.mean((y - mean) ** 2, axis=0, keepdims=True)
        y = (y - mean) * jax.lax.rsqrt(var + EPS)
    o_ref[...] = y.astype(o_ref.dtype)


def mlp_forward(x, weights_t):
    """Fused MLP forward. weights_t[i] has shape (d_in_i, d_out_i)."""
    n, d_in = x.shape
    d_out = weights_t[-1].shape[1]

    # Pad all feature dims to multiples of 128 (lane-dense loads/stores).
    d_in_p = _round_up(d_in, LANE)
    x_p = jnp.pad(x, ((0, 0), (0, d_in_p - d_in)))

    w_p = []
    prev_p = d_in_p
    for w in weights_t:
        di, do = w.shape
        assert di <= prev_p
        do_p = _round_up(do, LANE)
        w_p.append(jnp.pad(w, ((0, prev_p - di), (0, do_p - do))))
        prev_p = do_p
    d_out_p = prev_p

    # Total VMEM footprint (x + all weights + out, f32) is well under every
    # generation's scoped VMEM default (v7x: 32 MiB scoped / 64 MiB physical),
    # so everything is mapped as whole-array VMEM blocks with no grid.
    out_p = pl.pallas_call(
        fused_mlp_kernel,
        out_shape=jax.ShapeDtypeStruct((n, d_out_p), x.dtype),
        in_specs=[pl.BlockSpec(memory_space=pltpu.MemorySpace.VMEM)]
        * (1 + len(w_p)),
        out_specs=pl.BlockSpec(memory_space=pltpu.MemorySpace.VMEM),
    )(x_p, *w_p)
    return out_p[:, :d_out]


def mlp_reference(x, weights_t):
    """Pure-JAX reference mirroring the PyTorch forward (training-mode BN)."""
    for w_t in weights_t:
        y = x @ w_t
        y = jnp.where(y >= 0.0, y, NEG_SLOPE * y)
        mean = jnp.mean(y, axis=0, keepdims=True)
        var = jnp.mean((y - mean) ** 2, axis=0, keepdims=True)
        x = (y - mean) * jax.lax.rsqrt(var + EPS)
    return x


def init_weights(key, dims):
    """Deterministic Kaiming-uniform-ish init; weights stored as (in, out)."""
    weights_t = []
    for i in range(len(dims) - 1):
        key, sub = jax.random.split(key)
        fan_in = dims[i]
        bound = 1.0 / jnp.sqrt(fan_in)
        w = jax.random.uniform(
            sub, (dims[i + 1], dims[i]), jnp.float32, -bound, bound
        )  # PyTorch layout (out, in)
        weights_t.append(w.T)  # store transposed (in, out) for the kernel
    return weights_t


if __name__ == "__main__":
    # MLP(input_dim=256, output_dim=64, hidden_dim=[128], bias=False, dropout=0.0)
    batch = 8
    input_dim, hidden_dim, output_dim = 256, [128], 64
    dims = [input_dim] + hidden_dim + [output_dim]

    key = jax.random.PRNGKey(0)
    key, xkey = jax.random.split(key)
    x = jax.random.normal(xkey, (batch, input_dim), jnp.float32)
    weights_t = init_weights(key, dims)

    out = jax.block_until_ready(mlp_forward(x, weights_t))
    ref = jax.block_until_ready(mlp_reference(x, weights_t))

    assert out.shape == (batch, output_dim), out.shape
    assert jnp.allclose(out, ref, atol=1e-4, rtol=1e-4), float(
        jnp.max(jnp.abs(out - ref))
    )
    print("KERNEL_OK")
</pallas_src>

<mosaic_0001>
module attributes {stable_mosaic.version = 11 : i64} {
  func.func @fused_mlp_kernel(%arg0: memref<8x256xf32, #tpu.memory_space<vmem>>, %arg1: memref<256x128xf32, #tpu.memory_space<vmem>>, %arg2: memref<128x128xf32, #tpu.memory_space<vmem>>, %arg3: memref<8x128xf32, #tpu.memory_space<vmem>>) attributes {dimension_semantics = [], scalar_prefetch = 0 : i64, scratch_operands = 0 : i64, tpu.core_type = #tpu.core_type<tc>} {
    %c0 = arith.constant 0 : index
    %c0_0 = arith.constant 0 : index
    %0 = vector.load %arg0[%c0, %c0_0] : memref<8x256xf32, #tpu.memory_space<vmem>>, vector<8x256xf32>
    %c0_1 = arith.constant 0 : index
    %c0_2 = arith.constant 0 : index
    %1 = vector.load %arg1[%c0_1, %c0_2] : memref<256x128xf32, #tpu.memory_space<vmem>>, vector<256x128xf32>
    %cst = arith.constant dense<0.000000e+00> : vector<8x128xf32>
    %2 = tpu.matmul %0, %1, %cst {dimension_numbers = #tpu.dot_dimension_numbers<[1], [0], [0], [1], [0, 0, 1, 1], [], []>} : vector<8x256xf32>, vector<256x128xf32>, vector<8x128xf32> -> vector<8x128xf32>
    %cst_3 = arith.constant 0.000000e+00 : f32
    %3 = vector.broadcast %cst_3 : f32 to vector<8x128xf32>
    %4 = arith.cmpf oge, %2, %3 : vector<8x128xf32>
    %cst_4 = arith.constant 0.00999999977 : f32
    %5 = vector.broadcast %cst_4 : f32 to vector<8x128xf32>
    %6 = arith.mulf %5, %2 : vector<8x128xf32>
    %7 = arith.select %4, %2, %6 : vector<8x128xi1>, vector<8x128xf32>
    %cst_5 = arith.constant dense<0.000000e+00> : vector<128xf32>
    %8 = vector.multi_reduction <add>, %7, %cst_5 [0] : vector<8x128xf32> to vector<128xf32>
    %9 = vector.shape_cast %8 : vector<128xf32> to vector<1x128xf32>
    %cst_6 = arith.constant 8.000000e+00 : f32
    %10 = vector.broadcast %cst_6 : f32 to vector<1x128xf32>
    %11 = arith.divf %9, %10 : vector<1x128xf32>
    %12 = vector.broadcast %11 : vector<1x128xf32> to vector<8x128xf32>
    %13 = arith.subf %7, %12 : vector<8x128xf32>
    %14 = arith.mulf %13, %13 : vector<8x128xf32>
    %cst_7 = arith.constant dense<0.000000e+00> : vector<128xf32>
    %15 = vector.multi_reduction <add>, %14, %cst_7 [0] : vector<8x128xf32> to vector<128xf32>
    %16 = vector.shape_cast %15 : vector<128xf32> to vector<1x128xf32>
    %cst_8 = arith.constant 8.000000e+00 : f32
    %17 = vector.broadcast %cst_8 : f32 to vector<1x128xf32>
    %18 = arith.divf %16, %17 : vector<1x128xf32>
    %19 = vector.broadcast %11 : vector<1x128xf32> to vector<8x128xf32>
    %20 = arith.subf %7, %19 : vector<8x128xf32>
    %cst_9 = arith.constant 9.99999974E-6 : f32
    %21 = vector.broadcast %cst_9 : f32 to vector<1x128xf32>
    %22 = arith.addf %18, %21 : vector<1x128xf32>
    %23 = math.rsqrt %22 : vector<1x128xf32>
    %24 = vector.broadcast %23 : vector<1x128xf32> to vector<8x128xf32>
    %25 = arith.mulf %20, %24 : vector<8x128xf32>
    %c0_10 = arith.constant 0 : index
    %c0_11 = arith.constant 0 : index
    %26 = vector.load %arg2[%c0_10, %c0_11] : memref<128x128xf32, #tpu.memory_space<vmem>>, vector<128x128xf32>
    %cst_12 = arith.constant dense<0.000000e+00> : vector<8x128xf32>
    %27 = tpu.matmul %25, %26, %cst_12 {dimension_numbers = #tpu.dot_dimension_numbers<[1], [0], [0], [1], [0, 0, 1, 1], [], []>} : vector<8x128xf32>, vector<128x128xf32>, vector<8x128xf32> -> vector<8x128xf32>
    %cst_13 = arith.constant 0.000000e+00 : f32
    %28 = vector.broadcast %cst_13 : f32 to vector<8x128xf32>
    %29 = arith.cmpf oge, %27, %28 : vector<8x128xf32>
    %cst_14 = arith.constant 0.00999999977 : f32
    %30 = vector.broadcast %cst_14 : f32 to vector<8x128xf32>
    %31 = arith.mulf %30, %27 : vector<8x128xf32>
    %32 = arith.select %29, %27, %31 : vector<8x128xi1>, vector<8x128xf32>
    %cst_15 = arith.constant dense<0.000000e+00> : vector<128xf32>
    %33 = vector.multi_reduction <add>, %32, %cst_15 [0] : vector<8x128xf32> to vector<128xf32>
    %34 = vector.shape_cast %33 : vector<128xf32> to vector<1x128xf32>
    %cst_16 = arith.constant 8.000000e+00 : f32
    %35 = vector.broadcast %cst_16 : f32 to vector<1x128xf32>
    %36 = arith.divf %34, %35 : vector<1x128xf32>
    %37 = vector.broadcast %36 : vector<1x128xf32> to vector<8x128xf32>
    %38 = arith.subf %32, %37 : vector<8x128xf32>
    %39 = arith.mulf %38, %38 : vector<8x128xf32>
    %cst_17 = arith.constant dense<0.000000e+00> : vector<128xf32>
    %40 = vector.multi_reduction <add>, %39, %cst_17 [0] : vector<8x128xf32> to vector<128xf32>
    %41 = vector.shape_cast %40 : vector<128xf32> to vector<1x128xf32>
    %cst_18 = arith.constant 8.000000e+00 : f32
    %42 = vector.broadcast %cst_18 : f32 to vector<1x128xf32>
    %43 = arith.divf %41, %42 : vector<1x128xf32>
    %44 = vector.broadcast %36 : vector<1x128xf32> to vector<8x128xf32>
    %45 = arith.subf %32, %44 : vector<8x128xf32>
    %cst_19 = arith.constant 9.99999974E-6 : f32
    %46 = vector.broadcast %cst_19 : f32 to vector<1x128xf32>
    %47 = arith.addf %43, %46 : vector<1x128xf32>
    %48 = math.rsqrt %47 : vector<1x128xf32>
    %49 = vector.broadcast %48 : vector<1x128xf32> to vector<8x128xf32>
    %50 = arith.mulf %45, %49 : vector<8x128xf32>
    %c0_20 = arith.constant 0 : index
    %c0_21 = arith.constant 0 : index
    %51 = vector.load %arg3[%c0_20, %c0_21] : memref<8x128xf32, #tpu.memory_space<vmem>>, vector<8x128xf32>
    tpu.vector_store %arg3[%c0_20, %c0_21], %50 {strides = array<i32>} : memref<8x128xf32, #tpu.memory_space<vmem>>, vector<8x128xf32>,
    return
  }
}

</mosaic_0001>

<llo_original>
// kernel: tpu_custom_call.1
$region0: #{tpu_custom_call.1}
  #allocation0 [shape = 'u32[]', space=smem, size = 0x4, offset = 0x4, fixed_abs, tag = 'smem constant byte address 0x4 - core index']
  #allocation1 [shape = 'u32[144,128]{1,0:T(1,128)}', space=vmem, size = 0x12000, scoped, tag = 'internal scratch']
  %s0 = inlined_call_operand.hbm [shape: f32[8,256], index: 0, kind: input, shape index: {}]
  %s1 = inlined_call_operand.hbm [shape: f32[256,128], index: 1, kind: input, shape index: {}]
  %s2 = inlined_call_operand.hbm [shape: f32[128,128], index: 2, kind: input, shape index: {}]
  %s3 = inlined_call_operand.hbm [shape: f32[8,128], index: 3, kind: output, shape index: {}]
  %s4 = sld [smem:[#allocation0]]
  $region34: #{tpu_custom_call.1} parent=0
    _
  %s6 = ssub.s32 1, %s4
  %s7 = scalar_select 0, %s6, %s4
  $region1: #{tpu_custom_call.1} parent=0
    #allocation2 [shape = 'u8[8192]{0}', space=vmem, size = 0x2000, scoped, tag = 'input window, operand 0, single buffered']
    #allocation3 [shape = 's32[1]{0}', space=sflag, size = 0x4, scoped, tag = 'scoped memory for tpu_custom_call.1']
    #allocation4 [shape = 's32[1]{0}', space=sflag, size = 0x4, scoped, tag = 'scoped memory for tpu_custom_call.1']
    #allocation5 [shape = 'u8[131072]{0}', space=vmem, size = 0x20000, scoped, tag = 'input window, operand 1, single buffered']
    #allocation6 [shape = 's32[1]{0}', space=sflag, size = 0x4, scoped, tag = 'scoped memory for tpu_custom_call.1']
    #allocation7 [shape = 'u8[65536]{0}', space=vmem, size = 0x10000, scoped, tag = 'input window, operand 2, single buffered']
    #allocation8 [shape = 'u8[4096]{0}', space=vmem, size = 0x1000, scoped, tag = 'output window, operand 0, single buffered']
    %8 = vsyncpa [#allocation3], 0
    %9 = vsyncpa [#allocation6], 0
    %10 = vsyncpa [#allocation4], 0
    // Predicated region
    $region2: #{tpu_custom_call.1} parent=1 // pred_check
      _
    $region3: #{tpu_custom_call.1} parent=1 // pred_check_branch
      %12 = sbr.rel (0) target = $region5
    $region4: #{tpu_custom_call.1} parent=1 // pred_region
      %s14 = ssub.s32 256, 256
      %15 = vsyncadd [#allocation3], %s14
      %s17 = sshll.u32 [#allocation2], 4
      %s18 = int_to_ptr.vmem [resolvable:$true] %s17
      %20 = dma.hbm_to_vmem [thread:$0]  %s0, 256, %s18, [#allocation3]
    $region5: #{tpu_custom_call.1} parent=1 // pred_fallthru
      _
    // Predicated region
    $region6: #{tpu_custom_call.1} parent=1 // pred_check
      _
    $region7: #{tpu_custom_call.1} parent=1 // pred_check_branch
      %22 = sbr.rel (0) target = $region9
    $region8: #{tpu_custom_call.1} parent=1 // pred_region
      %s24 = ssub.s32 4096, 4096
      %25 = vsyncadd [#allocation6], %s24
      %s26 = sshll.u32 [#allocation5], 4
      %s27 = int_to_ptr.vmem [resolvable:$true] %s26
      %32 = dma.hbm_to_vmem [thread:$0]  %s1, 4096, %s27, [#allocation6], 128, 128, 8
    $region9: #{tpu_custom_call.1} parent=1 // pred_fallthru
      _
    // Predicated region
    $region10: #{tpu_custom_call.1} parent=1 // pred_check
      _
    $region11: #{tpu_custom_call.1} parent=1 // pred_check_branch
      %34 = sbr.rel (0) target = $region13
    $region12: #{tpu_custom_call.1} parent=1 // pred_region
      %s36 = ssub.s32 2048, 2048
      %37 = vsyncadd [#allocation6], %s36
      %s38 = sshll.u32 [#allocation7], 4
      %s39 = int_to_ptr.vmem [resolvable:$true] %s38
      %44 = dma.hbm_to_vmem [thread:$0]  %s2, 2048, %s39, [#allocation6], 128, 128, 8
    $region13: #{tpu_custom_call.1} parent=1 // pred_fallthru
      _
    // Predicated region
    $region14: #{tpu_custom_call.1} parent=1 // pred_check
      _
    $region15: #{tpu_custom_call.1} parent=1 // pred_check_branch
      %46 = sbr.rel (0) target = $region17
    $region16: #{tpu_custom_call.1} parent=1 // pred_region
      %47 = dma.done [#allocation3], 256
    $region17: #{tpu_custom_call.1} parent=1 // pred_fallthru
      _
    // Predicated region
    $region18: #{tpu_custom_call.1} parent=1 // pred_check
      _
    $region19: #{tpu_custom_call.1} parent=1 // pred_check_branch
      %49 = sbr.rel (0) target = $region21
    $region20: #{tpu_custom_call.1} parent=1 // pred_region
      %50 = dma.done [#allocation6], 4096
    $region21: #{tpu_custom_call.1} parent=1 // pred_fallthru
      _
    // Predicated region
    $region22: #{tpu_custom_call.1} parent=1 // pred_check
      _
    $region23: #{tpu_custom_call.1} parent=1 // pred_check_branch
      %52 = sbr.rel (0) target = $region25
    $region24: #{tpu_custom_call.1} parent=1 // pred_region
      %53 = dma.done [#allocation6], 2048
    $region25: #{tpu_custom_call.1} parent=1 // pred_fallthru
      _
    %v54 = vld [vmem:[#allocation2] sm:$0xff]
    %v55 = vld [vmem:[#allocation2 + $0x8] sm:$0xff]
    %v56 = vld [vmem:[#allocation5] sm:$0xff]
    %v57 = vld [vmem:[#allocation5 + $0x8] sm:$0xff]
    %v58 = vld [vmem:[#allocation5 + $0x10] sm:$0xff]
    %v59 = vld [vmem:[#allocation5 + $0x18] sm:$0xff]
    %v60 = vld [vmem:[#allocation5 + $0x20] sm:$0xff]
    %v61 = vld [vmem:[#allocation5 + $0x28] sm:$0xff]
    %v62 = vld [vmem:[#allocation5 + $0x30] sm:$0xff]
    %v63 = vld [vmem:[#allocation5 + $0x38] sm:$0xff]
    %v64 = vld [vmem:[#allocation5 + $0x40] sm:$0xff]
    %v65 = vld [vmem:[#allocation5 + $0x48] sm:$0xff]
    %v66 = vld [vmem:[#allocation5 + $0x50] sm:$0xff]
    %v67 = vld [vmem:[#allocation5 + $0x58] sm:$0xff]
    %v68 = vld [vmem:[#allocation5 + $0x60] sm:$0xff]
    %v69 = vld [vmem:[#allocation5 + $0x68] sm:$0xff]
    %v70 = vld [vmem:[#allocation5 + $0x70] sm:$0xff]
    %v71 = vld [vmem:[#allocation5 + $0x78] sm:$0xff]
    %v72 = vld [vmem:[#allocation5 + $0x80] sm:$0xff]
    %v73 = vld [vmem:[#allocation5 + $0x88] sm:$0xff]
    %v74 = vld [vmem:[#allocation5 + $0x90] sm:$0xff]
    %v75 = vld [vmem:[#allocation5 + $0x98] sm:$0xff]
    %v76 = vld [vmem:[#allocation5 + $0xa0] sm:$0xff]
    %v77 = vld [vmem:[#allocation5 + $0xa8] sm:$0xff]
    %v78 = vld [vmem:[#allocation5 + $0xb0] sm:$0xff]
    %v79 = vld [vmem:[#allocation5 + $0xb8] sm:$0xff]
    %v80 = vld [vmem:[#allocation5 + $0xc0] sm:$0xff]
    %v81 = vld [vmem:[#allocation5 + $0xc8] sm:$0xff]
    %v82 = vld [vmem:[#allocation5 + $0xd0] sm:$0xff]
    %v83 = vld [vmem:[#allocation5 + $0xd8] sm:$0xff]
    %v84 = vld [vmem:[#allocation5 + $0xe0] sm:$0xff]
    %v85 = vld [vmem:[#allocation5 + $0xe8] sm:$0xff]
    %v86 = vld [vmem:[#allocation5 + $0xf0] sm:$0xff]
    %v87 = vld [vmem:[#allocation5 + $0xf8] sm:$0xff]
    %88 = vmatprep.subr.mxu0 0.0
    %89 = vmatpush1.msra.mxu0 %v71
    %90 = vmatprep.subr.mxu0 0.0
    %91 = vmatpush1.msra.mxu0 %v70
    %92 = vmatprep.subr.mxu0 0.0
    %93 = vmatpush1.msra.mxu0 %v69
    %94 = vmatprep.subr.mxu0 0.0
    %95 = vmatpush1.msra.mxu0 %v68
    %96 = vmatprep.subr.mxu0 0.0
    %97 = vmatpush1.msra.mxu0 %v67
    %98 = vmatprep.subr.mxu0 0.0
    %99 = vmatpush1.msra.mxu0 %v66
    %100 = vmatprep.subr.mxu0 0.0
    %101 = vmatpush1.msra.mxu0 %v65
    %102 = vmatprep.subr.mxu0 0.0
    %103 = vmatpush1.msra.mxu0 %v64
    %104 = vmatprep.subr.mxu0 0.0
    %105 = vmatpush1.msra.mxu0 %v63
    %106 = vmatprep.subr.mxu0 0.0
    %107 = vmatpush1.msra.mxu0 %v62
    %108 = vmatprep.subr.mxu0 0.0
    %109 = vmatpush1.msra.mxu0 %v61
    %110 = vmatprep.subr.mxu0 0.0
    %111 = vmatpush1.msra.mxu0 %v60
    %112 = vmatprep.subr.mxu0 0.0
    %113 = vmatpush1.msra.mxu0 %v59
    %114 = vmatprep.subr.mxu0 0.0
    %115 = vmatpush1.msra.mxu0 %v58
    %116 = vmatprep.subr.mxu0 0.0
    %117 = vmatpush1.msra.mxu0 %v57
    %118 = vmatprep.subr.mxu0 0.0
    %119 = vmatpush1.msra.mxu0 %v56
    %120 = vmatprep.subr.mxu0 0.0
    %121 = vmatpush2.msra.mxu0 %v87
    %122 = vmatprep.subr.mxu0 0.0
    %123 = vmatpush2.msra.mxu0 %v86
    %124 = vmatprep.subr.mxu0 0.0
    %125 = vmatpush2.msra.mxu0 %v85
    %126 = vmatprep.subr.mxu0 0.0
    %127 = vmatpush2.msra.mxu0 %v84
    %128 = vmatprep.subr.mxu0 0.0
    %129 = vmatpush2.msra.mxu0 %v83
    %130 = vmatprep.subr.mxu0 0.0
    %131 = vmatpush2.msra.mxu0 %v82
    %132 = vmatprep.subr.mxu0 0.0
    %133 = vmatpush2.msra.mxu0 %v81
    %134 = vmatprep.subr.mxu0 0.0
    %135 = vmatpush2.msra.mxu0 %v80
    %136 = vmatprep.subr.mxu0 0.0
    %137 = vmatpush2.msra.mxu0 %v79
    %138 = vmatprep.subr.mxu0 0.0
    %139 = vmatpush2.msra.mxu0 %v78
    %140 = vmatprep.subr.mxu0 0.0
    %141 = vmatpush2.msra.mxu0 %v77
    %142 = vmatprep.subr.mxu0 0.0
    %143 = vmatpush2.msra.mxu0 %v76
    %144 = vmatprep.subr.mxu0 0.0
    %145 = vmatpush2.msra.mxu0 %v75
    %146 = vmatprep.subr.mxu0 0.0
    %147 = vmatpush2.msra.mxu0 %v74
    %148 = vmatprep.subr.mxu0 0.0
    %149 = vmatpush2.msra.mxu0 %v73
    %150 = vmatprep.subr.mxu0 0.0
    %151 = vmatpush2.msra.mxu0 %v72
    %152 = vmatprep.mubr.f32.mxu0 %v55
    %153 = vmatmul.mubr.f32.gmra.mxu0 %v54
    %v154 = vpop.f32.mrf.mxu0
    %v155 = vadd.f32 0.0, %v154
    %v156 = vpop.f32.mrf.mxu0
    %157 = vdwg.mxu0
    %vm158 = vcmp.ge.f32.partialorder %v155, 0.0
    %v159 = vmul.f32 %v155, 0.01
    %v160 = vsel %vm158, %v155, %v159
    %v161 = vrot.slane %v160, 4
    %v162 = vadd.f32 %v160, %v161
    %v163 = vrot.slane %v162, 2
    %v164 = vadd.f32 %v162, %v163
    %v165 = vrot.slane %v164, 1
    %v166 = vadd.f32 %v164, %v165
    %v167 = vrcp.pop 8.0
    %v168 = vmul.f32 %v166, %v167
    %v169 = vsub.f32 %v160, %v168
    %v170 = vmul.f32 %v169, %v169
    %v171 = vrot.slane %v170, 4
    %v172 = vadd.f32 %v170, %v171
    %v173 = vrot.slane %v172, 2
    %v174 = vadd.f32 %v172, %v173
    %v175 = vrot.slane %v174, 1
    %v176 = vadd.f32 %v174, %v175
    %v177 = vmul.f32 %v176, %v167
    %v178 = vadd.f32 %v177, 1e-05
    %v179 = vrsqrt.pop %v178
    %v180 = vmul.f32 %v169, %v179
    %v181 = vld [vmem:[#allocation7] sm:$0xff]
    %v182 = vld [vmem:[#allocation7 + $0x8] sm:$0xff]
    %v183 = vld [vmem:[#allocation7 + $0x10] sm:$0xff]
    %v184 = vld [vmem:[#allocation7 + $0x18] sm:$0xff]
    %v185 = vld [vmem:[#allocation7 + $0x20] sm:$0xff]
    %v186 = vld [vmem:[#allocation7 + $0x28] sm:$0xff]
    %v187 = vld [vmem:[#allocation7 + $0x30] sm:$0xff]
    %v188 = vld [vmem:[#allocation7 + $0x38] sm:$0xff]
    %v189 = vld [vmem:[#allocation7 + $0x40] sm:$0xff]
    %v190 = vld [vmem:[#allocation7 + $0x48] sm:$0xff]
    %v191 = vld [vmem:[#allocation7 + $0x50] sm:$0xff]
    %v192 = vld [vmem:[#allocation7 + $0x58] sm:$0xff]
    %v193 = vld [vmem:[#allocation7 + $0x60] sm:$0xff]
    %v194 = vld [vmem:[#allocation7 + $0x68] sm:$0xff]
    %v195 = vld [vmem:[#allocation7 + $0x70] sm:$0xff]
    %v196 = vld [vmem:[#allocation7 + $0x78] sm:$0xff]
    %197 = vmatprep.subr.mxu0 0.0
    %198 = vmatpush1.msra.mxu0 %v196
    %199 = vmatprep.subr.mxu0 0.0
    %200 = vmatpush1.msra.mxu0 %v195
    %201 = vmatprep.subr.mxu0 0.0
    %202 = vmatpush1.msra.mxu0 %v194
    %203 = vmatprep.subr.mxu0 0.0
    %204 = vmatpush1.msra.mxu0 %v193
    %205 = vmatprep.subr.mxu0 0.0
    %206 = vmatpush1.msra.mxu0 %v192
    %207 = vmatprep.subr.mxu0 0.0
    %208 = vmatpush1.msra.mxu0 %v191
    %209 = vmatprep.subr.mxu0 0.0
    %210 = vmatpush1.msra.mxu0 %v190
    %211 = vmatprep.subr.mxu0 0.0
    %212 = vmatpush1.msra.mxu0 %v189
    %213 = vmatprep.subr.mxu0 0.0
    %214 = vmatpush1.msra.mxu0 %v188
    %215 = vmatprep.subr.mxu0 0.0
    %216 = vmatpush1.msra.mxu0 %v187
    %217 = vmatprep.subr.mxu0 0.0
    %218 = vmatpush1.msra.mxu0 %v186
    %219 = vmatprep.subr.mxu0 0.0
    %220 = vmatpush1.msra.mxu0 %v185
    %221 = vmatprep.subr.mxu0 0.0
    %222 = vmatpush1.msra.mxu0 %v184
    %223 = vmatprep.subr.mxu0 0.0
    %224 = vmatpush1.msra.mxu0 %v183
    %225 = vmatprep.subr.mxu0 0.0
    %226 = vmatpush1.msra.mxu0 %v182
    %227 = vmatprep.subr.mxu0 0.0
    %228 = vmatpush1.msra.mxu0 %v181
    %229 = vmatprep.subr.mxu0 0.0
    %230 = vmatpush2.msra.mxu0 0.0
    %231 = vmatprep.subr.mxu0 0.0
    %232 = vmatpush2.msra.mxu0 0.0
    %233 = vmatprep.subr.mxu0 0.0
    %234 = vmatpush2.msra.mxu0 0.0
    %235 = vmatprep.subr.mxu0 0.0
    %236 = vmatpush2.msra.mxu0 0.0
    %237 = vmatprep.subr.mxu0 0.0
    %238 = vmatpush2.msra.mxu0 0.0
    %239 = vmatprep.subr.mxu0 0.0
    %240 = vmatpush2.msra.mxu0 0.0
    %241 = vmatprep.subr.mxu0 0.0
    %242 = vmatpush2.msra.mxu0 0.0
    %243 = vmatprep.subr.mxu0 0.0
    %244 = vmatpush2.msra.mxu0 0.0
    %245 = vmatprep.subr.mxu0 0.0
    %246 = vmatpush2.msra.mxu0 0.0
    %247 = vmatprep.subr.mxu0 0.0
    %248 = vmatpush2.msra.mxu0 0.0
    %249 = vmatprep.subr.mxu0 0.0
    %250 = vmatpush2.msra.mxu0 0.0
    %251 = vmatprep.subr.mxu0 0.0
    %252 = vmatpush2.msra.mxu0 0.0
    %253 = vmatprep.subr.mxu0 0.0
    %254 = vmatpush2.msra.mxu0 0.0
    %255 = vmatprep.subr.mxu0 0.0
    %256 = vmatpush2.msra.mxu0 0.0
    %257 = vmatprep.subr.mxu0 0.0
    %258 = vmatpush2.msra.mxu0 0.0
    %259 = vmatprep.subr.mxu0 0.0
    %260 = vmatpush2.msra.mxu0 0.0
    %261 = vmatprep.mubr.f32.mxu0 0.0
    %262 = vmatmul.mubr.f32.gmra.mxu0 %v180
    %v263 = vpop.f32.mrf.mxu0
    %v264 = vadd.f32 0.0, %v263
    %v265 = vpop.f32.mrf.mxu0
    %266 = vdwg.mxu0
    %vm267 = vcmp.ge.f32.partialorder %v264, 0.0
    %v268 = vmul.f32 %v264, 0.01
    %v269 = vsel %vm267, %v264, %v268
    %v270 = vrot.slane %v269, 4
    %v271 = vadd.f32 %v269, %v270
    %v272 = vrot.slane %v271, 2
    %v273 = vadd.f32 %v271, %v272
    %v274 = vrot.slane %v273, 1
    %v275 = vadd.f32 %v273, %v274
    %v276 = vmul.f32 %v275, %v167
    %v277 = vsub.f32 %v269, %v276
    %v278 = vmul.f32 %v277, %v277
    %v279 = vrot.slane %v278, 4
    %v280 = vadd.f32 %v278, %v279
    %v281 = vrot.slane %v280, 2
    %v282 = vadd.f32 %v280, %v281
    %v283 = vrot.slane %v282, 1
    %v284 = vadd.f32 %v282, %v283
    %v285 = vmul.f32 %v284, %v167
    %v286 = vadd.f32 %v285, 1e-05
    %v287 = vrsqrt.pop %v286
    %v288 = vmul.f32 %v277, %v287
    %289 = vst [vmem:[#allocation8] sm:$0xff] %v288
    // Predicated region
    $region26: #{tpu_custom_call.1} parent=1 // pred_check
      _
    $region27: #{tpu_custom_call.1} parent=1 // pred_check_branch
      %291 = sbr.rel (0) target = $region29
    $region28: #{tpu_custom_call.1} parent=1 // pred_region
      %s293 = ssub.s32 128, 128
      %294 = vsyncadd [#allocation4], %s293
      %s296 = sshll.u32 [#allocation8], 4
      %s297 = int_to_ptr.vmem [resolvable:$true] %s296
      %299 = dma.vmem_to_hbm [thread:$0]  %s297, 128, %s3, [#allocation4]
    $region29: #{tpu_custom_call.1} parent=1 // pred_fallthru
      _
    // Predicated region
    $region30: #{tpu_custom_call.1} parent=1 // pred_check
      _
    $region31: #{tpu_custom_call.1} parent=1 // pred_check_branch
      %301 = sbr.rel (0) target = $region33
    $region32: #{tpu_custom_call.1} parent=1 // pred_region
      %302 = dma.done [#allocation4], 128
    $region33: #{tpu_custom_call.1} parent=1 // pred_fallthru
      _
    %303 = vsyncpa [#allocation3], 1
    %304 = vsyncpa [#allocation6], 1
    %305 = vsyncpa [#allocation4], 1

</llo_original>
